<compile_context>
chip_gen: v7x
topology: tpu7x:2x2x1
jax: 0.10.0
libtpu: 0.0.40
codegen_flags: <defaults>
</compile_context>

<pallas_src>
import functools

import jax
import jax.numpy as jnp
from jax import lax
from jax.experimental import pallas as pl
from jax.experimental.pallas import tpu as pltpu


def _smooth_ce_kernel(pred_ref, tgt_ref, loss_ref, *, class_num, label_smooth):
    pred_raw = pred_ref[...]                       # [TN, C] native dtype (bf16/f32)
    tgt = tgt_ref[...]                             # [TN, 1] int32
    tn, c = pred_raw.shape

    col = lax.broadcasted_iota(jnp.int32, (tn, c), 1)            # [TN, C]

    # Target gather and row max in the *input* dtype: the single nonzero per
    # row makes the masked sum exact, and on v6e/v7x the cmp/select/accumulate
    # run at 2x bf16 VPU density (v5e upcasts internally, never worse).
    pred_at_t = jnp.sum(
        jnp.where(col == tgt, pred_raw, jnp.zeros_like(pred_raw)),
        axis=1, keepdims=True).astype(jnp.float32)               # [TN, 1]
    m = jnp.max(pred_raw, axis=1, keepdims=True).astype(jnp.float32)  # [TN, 1]

    # Numerically stable log_softmax pieces; logprobs are never materialized.
    shifted = pred_raw.astype(jnp.float32) - m                   # [TN, C] f32
    lse = jnp.log(jnp.sum(jnp.exp(shifted), axis=1, keepdims=True))   # [TN, 1]
    row_sum = jnp.sum(shifted, axis=1, keepdims=True)                 # [TN, 1]
    shifted_at_t = pred_at_t - m                                      # [TN, 1]

    lo = jnp.float32(label_smooth / (class_num - 1))
    hi = jnp.float32(1.0 - label_smooth)

    # loss_i = -sum_j smoothed_ij * logprobs_ij, smoothed = lo + (hi-lo)*onehot.
    # (Matches the module's clip() form for the usual label_smooth regime where
    #  label_smooth/(C-1) <= 1 - label_smooth.)
    loss_ref[...] = -(lo * (row_sum - jnp.float32(class_num) * lse)
                      + (hi - lo) * (shifted_at_t - lse))
    # Rows past N in the (possibly partial) last tile are computed on padded
    # data but are never written back to the (N, 1) output, so no masking is
    # required here.


def _vmem_budget_and_limit():
    """Generation-aware (budget_for_tiling, mosaic_vmem_limit) in bytes."""
    cap = None
    try:
        cap = getattr(pltpu.get_tpu_info(), "vmem_capacity_bytes", None)
    except Exception:
        cap = None
    if cap is None or cap <= (64 << 20):
        # v7x (64 MiB VMEM per TensorCore) or unknown generation: conservative.
        return 20 << 20, 40 << 20
    # v5e / v6e: 128 MiB physical VMEM -> larger tiles, better pipelining.
    return 48 << 20, 80 << 20


def _choose_block_rows(n, c, itemsize, vmem_budget_bytes):
    """Largest sublane-pack-aligned row tile whose *total* VMEM footprint fits."""
    # Per pred row, live VMEM:
    #   * double-buffered input tile:                     2 * c * itemsize
    #   * in-kernel f32 temporaries (~3 live [TN, C]):    12 * c
    #   * lane-padded int32 target tile (x2 buffers):     2 * 128 * 4
    #   * lane-padded f32 per-row output tile (x2):       2 * 128 * 4
    per_row = 2 * c * itemsize + 12 * c + 2048
    tn_budget = vmem_budget_bytes // per_row
    # Byte-based cap (replaces the old fixed 1024-row cap): ~8 MiB of pred per
    # tile is plenty to hit the HBM roofline; larger only eats VMEM.
    tn_bytes = (8 << 20) // (c * itemsize)
    tn = max(8, min(tn_budget, tn_bytes))
    if tn >= n:
        return n                                   # single block; full-dim exempt
    # Round to the dtype's native sublane pack: 8 rows/vreg for f32, 16 for
    # bf16, 32 for int8/fp8.
    pack = max(8, 32 // itemsize)
    return max(pack, (tn // pack) * pack)


def smooth_ce_loss(pred, target, class_num, label_smooth=0.1, block_rows=None):
    """pred: [N, C] float (kept in its HBM dtype), target: [N] int -> f32 scalar."""
    # TODO(synk): the module's `label_smooth is None` fallback branch (plain CE
    # with gather + eps) is not implemented; only the default smoothing path is
    # translated.
    n, c = pred.shape
    assert c == class_num
    tgt2d = target.astype(jnp.int32).reshape(n, 1)

    itemsize = jnp.dtype(pred.dtype).itemsize
    vmem_budget, vmem_limit = _vmem_budget_and_limit()
    if block_rows is None:
        block_rows = _choose_block_rows(n, c, itemsize, vmem_budget)
    tn = min(block_rows, n)
    num_tiles = pl.cdiv(n, tn)

    kernel = functools.partial(
        _smooth_ce_kernel, class_num=class_num, label_smooth=label_smooth,
    )
    per_row = pl.pallas_call(
        kernel,
        out_shape=jax.ShapeDtypeStruct((n, 1), jnp.float32),
        grid_spec=pltpu.PrefetchScalarGridSpec(
            num_scalar_prefetch=0,
            grid=(num_tiles,),
            in_specs=[
                pl.BlockSpec((tn, c), lambda i: (i, 0)),   # pred row tile
                pl.BlockSpec((tn, 1), lambda i: (i, 0)),   # target row tile
            ],
            out_specs=pl.BlockSpec((tn, 1), lambda i: (i, 0)),  # per-row loss
        ),
        compiler_params=pltpu.CompilerParams(
            # No carried state across row tiles -> shard the grid across
            # TensorCores (2x on v7x megacore; neutral on v5e/v6e).
            dimension_semantics=("parallel",),
            vmem_limit_bytes=vmem_limit,
        ),
    )(pred, tgt2d)
    # Tiny final reduction (N floats) in plain JAX.
    return jnp.mean(per_row)


def _reference(pred, target, class_num, label_smooth=0.1):
    logprobs = jax.nn.log_softmax(pred.astype(jnp.float32), axis=1)
    onehot = jax.nn.one_hot(target, class_num, dtype=jnp.float32)
    smoothed = jnp.clip(onehot, label_smooth / (class_num - 1), 1.0 - label_smooth)
    return jnp.mean(-jnp.sum(smoothed * logprobs, axis=1))


if __name__ == "__main__":
    # C is lane-dense (multiple of 128); N is NOT a multiple of the row tile so
    # the partial-last-tile path is exercised.
    N, C = 50, 128
    key = jax.random.PRNGKey(0)
    kp, kt = jax.random.split(key)
    pred = jax.random.normal(kp, (N, C), dtype=jnp.float32)
    target = jax.random.randint(kt, (N,), 0, C, dtype=jnp.int32)

    ref = _reference(pred, target, class_num=C, label_smooth=0.1)

    # Multi-tile parallel grid with a partial last tile.
    loss_tiled = smooth_ce_loss(pred, target, class_num=C, label_smooth=0.1,
                                block_rows=16)
    loss_tiled = jax.block_until_ready(loss_tiled)
    assert jnp.allclose(loss_tiled, ref, atol=1e-5, rtol=1e-5), (loss_tiled, ref)

    # Auto tile sizing (collapses to a single full-extent block at this shape).
    loss_auto = smooth_ce_loss(pred, target, class_num=C, label_smooth=0.1)
    loss_auto = jax.block_until_ready(loss_auto)
    assert jnp.allclose(loss_auto, ref, atol=1e-5, rtol=1e-5), (loss_auto, ref)

    print("KERNEL_OK")
</pallas_src>

<mosaic_0001>
module attributes {stable_mosaic.version = 11 : i64} {
  func.func @_smooth_ce_kernel(%arg0: i32, %arg1: memref<16x128xf32, #tpu.memory_space<vmem>>, %arg2: memref<16x1xi32, #tpu.memory_space<vmem>>, %arg3: memref<16x1xf32, #tpu.memory_space<vmem>>) attributes {dimension_semantics = [#tpu.dimension_semantics<parallel>], iteration_bounds = array<i64: 4>, scalar_prefetch = 0 : i64, scratch_operands = 0 : i64, tpu.core_type = #tpu.core_type<tc>, window_params = [{transform_indices = @transform_0, window_bounds = array<i64: 16, 128>}, {transform_indices = @transform_1, window_bounds = array<i64: 16, 1>}, {transform_indices = @transform_2, window_bounds = array<i64: 16, 1>}]} {
    %c0 = arith.constant 0 : index
    %c0_0 = arith.constant 0 : index
    %0 = vector.load %arg1[%c0, %c0_0] : memref<16x128xf32, #tpu.memory_space<vmem>>, vector<16x128xf32>
    %c0_1 = arith.constant 0 : index
    %c0_2 = arith.constant 0 : index
    %1 = vector.load %arg2[%c0_1, %c0_2] : memref<16x1xi32, #tpu.memory_space<vmem>>, vector<16x1xi32>
    %2 = tpu.iota {dimensions = array<i32: 1>} : vector<16x128xi32>
    %3 = vector.broadcast %1 : vector<16x1xi32> to vector<16x128xi32>
    %4 = arith.cmpi eq, %2, %3 : vector<16x128xi32>
    %cst = arith.constant 0.000000e+00 : f32
    %5 = vector.broadcast %cst : f32 to vector<16x128xf32>
    %6 = arith.select %4, %0, %5 : vector<16x128xi1>, vector<16x128xf32>
    %cst_3 = arith.constant dense<0.000000e+00> : vector<16xf32>
    %7 = vector.multi_reduction <add>, %6, %cst_3 [1] : vector<16x128xf32> to vector<16xf32>
    %8 = vector.shape_cast %7 : vector<16xf32> to vector<16x1xf32>
    %cst_4 = arith.constant dense<0xFF800000> : vector<16xf32>
    %9 = vector.multi_reduction <maximumf>, %0, %cst_4 [1] : vector<16x128xf32> to vector<16xf32>
    %10 = vector.shape_cast %9 : vector<16xf32> to vector<16x1xf32>
    %11 = vector.broadcast %10 : vector<16x1xf32> to vector<16x128xf32>
    %12 = arith.subf %0, %11 : vector<16x128xf32>
    %13 = math.exp %12 : vector<16x128xf32>
    %cst_5 = arith.constant dense<0.000000e+00> : vector<16xf32>
    %14 = vector.multi_reduction <add>, %13, %cst_5 [1] : vector<16x128xf32> to vector<16xf32>
    %15 = vector.shape_cast %14 : vector<16xf32> to vector<16x1xf32>
    %16 = math.log %15 : vector<16x1xf32>
    %cst_6 = arith.constant dense<0.000000e+00> : vector<16xf32>
    %17 = vector.multi_reduction <add>, %12, %cst_6 [1] : vector<16x128xf32> to vector<16xf32>
    %18 = vector.shape_cast %17 : vector<16xf32> to vector<16x1xf32>
    %19 = arith.subf %8, %10 : vector<16x1xf32>
    %cst_7 = arith.constant 1.280000e+02 : f32
    %20 = vector.broadcast %cst_7 : f32 to vector<16x1xf32>
    %21 = arith.mulf %20, %16 : vector<16x1xf32>
    %22 = arith.subf %18, %21 : vector<16x1xf32>
    %cst_8 = arith.constant 7.87401571E-4 : f32
    %23 = vector.broadcast %cst_8 : f32 to vector<16x1xf32>
    %24 = arith.mulf %23, %22 : vector<16x1xf32>
    %cst_9 = arith.constant 0.899999976 : f32
    %cst_10 = arith.constant 7.87401571E-4 : f32
    %25 = arith.subf %cst_9, %cst_10 : f32
    %26 = arith.subf %19, %16 : vector<16x1xf32>
    %27 = vector.broadcast %25 : f32 to vector<16x1xf32>
    %28 = arith.mulf %27, %26 : vector<16x1xf32>
    %29 = arith.addf %24, %28 : vector<16x1xf32>
    %cst_11 = arith.constant 0.000000e+00 : f32
    %30 = vector.broadcast %cst_11 : f32 to vector<16x1xf32>
    %31 = arith.subf %30, %29 : vector<16x1xf32>
    %c0_12 = arith.constant 0 : index
    %c0_13 = arith.constant 0 : index
    %32 = vector.load %arg3[%c0_12, %c0_13] : memref<16x1xf32, #tpu.memory_space<vmem>>, vector<16x1xf32>
    tpu.vector_store %arg3[%c0_12, %c0_13], %31 {strides = array<i32>} : memref<16x1xf32, #tpu.memory_space<vmem>>, vector<16x1xf32>,
    return
  }
  func.func @transform_0(%arg0: i32) -> (i32, i32) {
    %c0_i32 = arith.constant 0 : i32
    %c0_i32_0 = arith.constant 0 : i32
    return %arg0, %c0_i32 : i32, i32
  }
  func.func @transform_1(%arg0: i32) -> (i32, i32) {
    %c0_i32 = arith.constant 0 : i32
    %c0_i32_0 = arith.constant 0 : i32
    return %arg0, %c0_i32 : i32, i32
  }
  func.func @transform_2(%arg0: i32) -> (i32, i32) {
    %c0_i32 = arith.constant 0 : i32
    %c0_i32_0 = arith.constant 0 : i32
    return %arg0, %c0_i32 : i32, i32
  }
}

</mosaic_0001>

<llo_original>
// kernel: tpu_custom_call.1
$region0: #{tpu_custom_call.1}
  #allocation0 [shape = 'u32[]', space=smem, size = 0x4, offset = 0x4, fixed_abs, tag = 'smem constant byte address 0x4 - core index']
  #allocation1 [shape = 'u32[144,128]{1,0:T(1,128)}', space=vmem, size = 0x12000, scoped, tag = 'internal scratch']
  %s0 = inlined_call_operand.vmem [shape: f32[50,128], index: 0, kind: input, shape index: {}]
  %s1 = inlined_call_operand.vmem [shape: s32[50,1], index: 1, kind: input, shape index: {}]
  %s2 = inlined_call_operand.vmem [shape: f32[50,1], index: 2, kind: output, shape index: {}]
  %s3 = sld [smem:[#allocation0]]
  $region89: #{tpu_custom_call.1} parent=0
    _
  %s5 = ssub.s32 1, %s3
  %s6 = scalar_select 0, %s5, %s3
  $region1: #{tpu_custom_call.1} parent=0
    #allocation2 [shape = 'u8[16384]{0}', space=vmem, size = 0x4000, scoped, tag = 'output window, operand 0']
    loop: start=0, step=1, limit=6
    $region2: #{tpu_custom_call.1} parent=1 // loop_pre_header
      _
    $region3: #{tpu_custom_call.1} parent=1 // loop_header
      %s8 = sphi 0, %s12
      %p9 = scmp.ge.s32.totalorder %s8, 6
      %s18 = sphi 0, %s20
      %s21 = sphi 0, %s18
      %s22 = sphi 0, %s21
      %s38 = sphi 0, %s22
      %s44 = sphi 0, %s46
      %s47 = sphi 0, %s44
      %s48 = sphi 0, %s47
      %s64 = sphi 0, %s48
      %s70 = sphi 0, %s72
      %s73 = sphi 0, %s70
      %s74 = sphi 0, %s73
      %s90 = sphi 0, %s74
    $region4: #{tpu_custom_call.1} parent=1 // loop_header_branch
      %11 = sbr.rel (%p9) target = $region8
    $region5: #{tpu_custom_call.1} parent=1 // loop_body
      %s13 = ssub.s32 %s8, 1
      %s14 = ssub.s32 %s8, 2
      %s15 = sadd.s32 %s8, 1
      %s16 = ssub.s32 %s8, %s15
      %p17 = scmp.eq.s32.totalorder %s16, 0
      %s19 = sadd.s32 %s18, 1
      %s20 = scalar_select %p17, %s18, %s19
      %p23 = pneg %p17
      %p24 = scmp.eq.s32.totalorder %s8, 3
      %p25 = por %p23, %p24
      %p26 = scmp.ne.s32.totalorder %s18, %s21
      %p27 = scmp.eq.s32.totalorder %s8, 0
      %p28 = por %p26, %p27
      %p29 = scmp.ne.s32.totalorder %s18, %s21
      %p30 = scmp.eq.s32.totalorder %s13, 3
      %p31 = por %p29, %p30
      %p32 = scmp.ne.s32.totalorder %s21, %s22
      %p33 = scmp.eq.s32.totalorder %s13, 0
      %p34 = por %p32, %p33
      %p35 = scmp.ne.s32.totalorder %s21, %s22
      %p36 = scmp.eq.s32.totalorder %s14, 3
      %p37 = por %p35, %p36
      %p39 = scmp.ne.s32.totalorder %s22, %s38
      %p40 = scmp.eq.s32.totalorder %s14, 0
      %p41 = por %p39, %p40
      %s42 = ssub.s32 %s8, %s15
      %p43 = scmp.eq.s32.totalorder %s42, 0
      %s45 = sadd.s32 %s44, 1
      %s46 = scalar_select %p43, %s44, %s45
      %p49 = pneg %p43
      %p50 = scmp.eq.s32.totalorder %s8, 3
      %p51 = por %p49, %p50
      %p52 = scmp.ne.s32.totalorder %s44, %s47
      %p53 = scmp.eq.s32.totalorder %s8, 0
      %p54 = por %p52, %p53
      %p55 = scmp.ne.s32.totalorder %s44, %s47
      %p56 = scmp.eq.s32.totalorder %s13, 3
      %p57 = por %p55, %p56
      %p58 = scmp.ne.s32.totalorder %s47, %s48
      %p59 = scmp.eq.s32.totalorder %s13, 0
      %p60 = por %p58, %p59
      %p61 = scmp.ne.s32.totalorder %s47, %s48
      %p62 = scmp.eq.s32.totalorder %s14, 3
      %p63 = por %p61, %p62
      %p65 = scmp.ne.s32.totalorder %s48, %s64
      %p66 = scmp.eq.s32.totalorder %s14, 0
      %p67 = por %p65, %p66
      %s68 = ssub.s32 %s8, %s15
      %p69 = scmp.eq.s32.totalorder %s68, 0
      %s71 = sadd.s32 %s70, 1
      %s72 = scalar_select %p69, %s70, %s71
      %p75 = pneg %p69
      %p76 = scmp.eq.s32.totalorder %s8, 3
      %p77 = por %p75, %p76
      %p78 = scmp.ne.s32.totalorder %s70, %s73
      %p79 = scmp.eq.s32.totalorder %s8, 0
      %p80 = por %p78, %p79
      %p81 = scmp.ne.s32.totalorder %s70, %s73
      %p82 = scmp.eq.s32.totalorder %s13, 3
      %p83 = por %p81, %p82
      %p84 = scmp.ne.s32.totalorder %s73, %s74
      %p85 = scmp.eq.s32.totalorder %s13, 0
      %p86 = por %p84, %p85
      %p87 = scmp.ne.s32.totalorder %s73, %s74
      %p88 = scmp.eq.s32.totalorder %s14, 3
      %p89 = por %p87, %p88
      %p91 = scmp.ne.s32.totalorder %s74, %s90
      %p92 = scmp.eq.s32.totalorder %s14, 0
      %p93 = por %p91, %p92
      %p94 = scmp.le.s32.totalorder 1, %s8
      %p95 = scmp.lt.s32.totalorder %s8, 5
      %p96 = pnand %p94, %p95
      %p97 = pneg %p96
      // Predicated region
      $region9: #{tpu_custom_call.1} parent=5 // pred_check
        _
      $region10: #{tpu_custom_call.1} parent=5 // pred_check_branch
        %99 = sbr.rel (%p96) target = $region12
      $region11: #{tpu_custom_call.1} parent=5 // pred_region
        %s100 = ssub.s32 %s8, 1
      $region12: #{tpu_custom_call.1} parent=5 // pred_fallthru
        _
      %p101 = scmp.lt.s32.totalorder %s8, 4
      // Predicated region
      $region13: #{tpu_custom_call.1} parent=5 // pred_check
        %p102 = pneg %p101
      $region14: #{tpu_custom_call.1} parent=5 // pred_check_branch
        %104 = sbr.rel (%p102) target = $region16
      $region15: #{tpu_custom_call.1} parent=5 // pred_region
        // Predicated region
        $region17: #{tpu_custom_call.1} parent=15 // pred_check
          %p105 = pneg %p28
        $region18: #{tpu_custom_call.1} parent=15 // pred_check_branch
          %107 = sbr.rel (%p105) target = $region20
        $region19: #{tpu_custom_call.1} parent=15 // pred_region
          %s108 = smul.u32 2, %s8
          %s109 = ssub.s32 7, %s108
          %p110 = scmp.lt.s32.totalorder %s109, 2
          %s111 = scalar_select %p110, %s109, 2
          %s112 = smul.u32 128, %s111
          %p113 = scmp.lt.s32.totalorder %s108, 6
          %s114 = scalar_select %p113, %s108, 6
          %s115 = smul.addr %s114, 8
          %s116 = scalar_lea.vmem %s0, %s115
          %s117 = smul.u32 2, %s8
          %s118 = ssub.s32 7, %s117
          %p119 = scmp.lt.s32.totalorder %s118, 2
          %s120 = scalar_select %p119, %s118, 2
          %s121 = smul.u32 128, %s120
        $region20: #{tpu_custom_call.1} parent=15 // pred_fallthru
          _
        // Predicated region
        $region21: #{tpu_custom_call.1} parent=15 // pred_check
          %p122 = pneg %p54
        $region22: #{tpu_custom_call.1} parent=15 // pred_check_branch
          %124 = sbr.rel (%p122) target = $region24
        $region23: #{tpu_custom_call.1} parent=15 // pred_region
          %s125 = smul.u32 2, %s8
          %s126 = ssub.s32 7, %s125
          %p127 = scmp.lt.s32.totalorder %s126, 2
          %s128 = scalar_select %p127, %s126, 2
          %s129 = smul.u32 128, %s128
          %p130 = scmp.lt.s32.totalorder %s125, 6
          %s131 = scalar_select %p130, %s125, 6
          %s132 = smul.addr %s131, 8
          %s133 = scalar_lea.vmem %s1, %s132
          %s134 = smul.u32 2, %s8
          %s135 = ssub.s32 7, %s134
          %p136 = scmp.lt.s32.totalorder %s135, 2
          %s137 = scalar_select %p136, %s135, 2
          %s138 = smul.u32 128, %s137
        $region24: #{tpu_custom_call.1} parent=15 // pred_fallthru
          _
      $region16: #{tpu_custom_call.1} parent=5 // pred_fallthru
        _
      %p139 = scmp.le.s32.totalorder 1, %s8
      %p140 = scmp.lt.s32.totalorder %s8, 5
      %p141 = pnand %p139, %p140
      %p142 = pneg %p141
      // Predicated region
      $region25: #{tpu_custom_call.1} parent=5 // pred_check
        _
      $region26: #{tpu_custom_call.1} parent=5 // pred_check_branch
        %144 = sbr.rel (%p141) target = $region28
      $region27: #{tpu_custom_call.1} parent=5 // pred_region
        %s145 = ssub.s32 %s8, 1
        %s146 = smul.u32 2, %s13
        %s147 = ssub.s32 7, %s146
        %p148 = scmp.lt.s32.totalorder %s147, 2
        %s149 = scalar_select %p148, %s147, 2
        %s150 = smul.u32 128, %s149
        %p151 = scmp.lt.s32.totalorder %s146, 6
        %s152 = scalar_select %p151, %s146, 6
        %s153 = smul.addr %s152, 8
        %s154 = scalar_lea.vmem %s0, %s153
        %p155 = pneg %p34
        %p156 = pneg %p31
        %s157 = smul.u32 2, %s13
        %s158 = ssub.s32 7, %s157
        %p159 = scmp.lt.s32.totalorder %s158, 2
        %s160 = scalar_select %p159, %s158, 2
        %s161 = smul.u32 128, %s160
        %p162 = scmp.lt.s32.totalorder %s157, 6
        %s163 = scalar_select %p162, %s157, 6
        %s164 = smul.addr %s163, 8
        %s165 = scalar_lea.vmem %s1, %s164
        %p166 = pneg %p60
        %p167 = pneg %p57
        %p168 = pneg %p86
        %p169 = pneg %p83
        %s170 = sand.u32 %s73, 1
        %s171 = sand.u32 %s73, 1
        %s172 = smul.addr %s171, 16
        %s173 = scalar_lea.vmem [#allocation2], %s172
        %s174 = smul.u32 2, %s13
        %s175 = ssub.s32 7, %s174
        %p176 = scmp.lt.s32.totalorder %s175, 2
        %s177 = scalar_select %p176, %s175, 2
        %s178 = smul.u32 128, %s177
        %p179 = scmp.lt.s32.totalorder %s174, 6
        %s180 = scalar_select %p179, %s174, 6
        %s181 = smul.addr %s180, 8
        %s182 = scalar_lea.vmem %s0, %s181
        %s183 = smul.u32 2, %s13
        %s184 = ssub.s32 7, %s183
        %p185 = scmp.lt.s32.totalorder %s184, 2
        %s186 = scalar_select %p185, %s184, 2
        %s187 = smul.u32 128, %s186
        %s188 = smul.u32 2, %s13
        %s189 = ssub.s32 7, %s188
        %p190 = scmp.lt.s32.totalorder %s189, 2
        %s191 = scalar_select %p190, %s189, 2
        %s192 = smul.u32 128, %s191
        %p193 = scmp.lt.s32.totalorder %s188, 6
        %s194 = scalar_select %p193, %s188, 6
        %s195 = smul.addr %s194, 8
        %s196 = scalar_lea.vmem %s1, %s195
        %s197 = smul.u32 2, %s13
        %s198 = ssub.s32 7, %s197
        %p199 = scmp.lt.s32.totalorder %s198, 2
        %s200 = scalar_select %p199, %s198, 2
        %s201 = smul.u32 128, %s200
        %s202 = smul.u32 2, %s13
        %s203 = ssub.s32 7, %s202
        %p204 = scmp.lt.s32.totalorder %s203, 2
        %s205 = scalar_select %p204, %s203, 2
        %s206 = smul.u32 128, %s205
        %v207 = vld [vmem:[%s182] sm:$0xff]
        %v208 = vld [vmem:[%s182 + $0x8] sm:$0xff]
        %v209 = vld [vmem:[%s196] sm:$0xff]
        %v210 = vld [vmem:[%s196 + $0x8] sm:$0xff]
        %v211 = vlaneseq
        %v212 = vand.u32 %v211, 127
        %213 = vset.pattern.permute.xlu0 0
        %214 = vperm.xlu0 %213, %v209
        %v215 = vpop.permute.xlu0 %214
        %216 = vset.pattern.permute.xlu0 0
        %217 = vperm.xlu0 %216, %v210
        %v218 = vpop.permute.xlu0 %217
        %vm219 = vcmp.eq.s32.totalorder %v212, %v215
        %vm220 = vcmp.eq.s32.totalorder %v212, %v218
        %v221 = vsel %vm219, %v207, 0.0
        %v222 = vsel %vm220, %v208, 0.0
        %223 = vadd.xlane.f32.xlu0 %v221
        %v224 = vpop.xlane.xlu0 %223
        %225 = vadd.xlane.f32.xlu0 %v222
        %v226 = vpop.xlane.xlu0 %225
        %227 = vmax.xlane.f32.xlu0 %v207
        %v228 = vpop.xlane.xlu0 %227
        %229 = vmax.xlane.f32.xlu0 %v208
        %v230 = vpop.xlane.xlu0 %229
        %v231 = vsub.f32 %v207, %v228
        %v232 = vsub.f32 %v208, %v230
        %v233 = vmul.f32 %v231, 1.442695
        %v234 = vpow.pop %v233
        %v235 = vmul.f32 %v232, 1.442695
        %v236 = vpow.pop %v235
        %237 = vadd.xlane.f32.xlu0 %v234
        %v238 = vpop.xlane.xlu0 %237
        %239 = vadd.xlane.f32.xlu0 %v236
        %v240 = vpop.xlane.xlu0 %239
        %v241 = vlog2.pop %v238
        %v242 = vmul.f32 %v241, 0.6931472
        %v243 = vlog2.pop %v240
        %v244 = vmul.f32 %v243, 0.6931472
        %245 = vadd.xlane.f32.xlu0 %v231
        %v246 = vpop.xlane.xlu0 %245
        %247 = vadd.xlane.f32.xlu0 %v232
        %v248 = vpop.xlane.xlu0 %247
        %v249 = vsub.f32 %v224, %v228
        %v250 = vsub.f32 %v226, %v230
        %v251 = vmul.f32 %v242, 128.0
        %v252 = vmul.f32 %v244, 128.0
        %v253 = vsub.f32 %v246, %v251
        %v254 = vsub.f32 %v248, %v252
        %v255 = vmul.f32 %v253, 0.0007874016
        %v256 = vmul.f32 %v254, 0.0007874016
        %v257 = vsub.f32 %v249, %v242
        %v258 = vsub.f32 %v250, %v244
        %v259 = vmul.f32 %v257, 0.8992126
        %v260 = vmul.f32 %v258, 0.8992126
        %v261 = vadd.f32 %v255, %v259
        %v262 = vadd.f32 %v256, %v260
        %v263 = vsub.f32 0.0, %v261
        %v264 = vsub.f32 0.0, %v262
        %vm265 = vcmask 7168
        %266 = vst.msk [vmem:[%s173] sm:$0xff] %vm265, %v263
        %267 = vst.msk [vmem:[%s173 + $0x8] sm:$0xff] %vm265, %v264
        %s268 = sand.u32 %s73, 1
        %s269 = sand.u32 %s73, 1
        %s270 = smul.addr %s269, 16
        %s271 = scalar_lea.vmem [#allocation2], %s270
        // Predicated region
        $region29: #{tpu_custom_call.1} parent=27 // pred_check
          %p272 = pneg %p83
        $region30: #{tpu_custom_call.1} parent=27 // pred_check_branch
          %274 = sbr.rel (%p272) target = $region32
        $region31: #{tpu_custom_call.1} parent=27 // pred_region
          %s275 = smul.u32 2, %s13
          %s276 = ssub.s32 7, %s275
          %p277 = scmp.lt.s32.totalorder %s276, 2
          %s278 = scalar_select %p277, %s276, 2
          %s279 = smul.u32 128, %s278
          %p280 = scmp.ne.s32.totalorder 0, %s279
          %s281 = smul.addr %s275, 8
          %s282 = scalar_lea.vmem %s2, %s281
          // Predicated region
          $region33: #{tpu_custom_call.1} parent=31 // pred_check
            %p283 = pneg %p280
          $region34: #{tpu_custom_call.1} parent=31 // pred_check_branch
            %285 = sbr.rel (%p283) target = $region36
          $region35: #{tpu_custom_call.1} parent=31 // pred_region
            // Predicated region
            $region37: #{tpu_custom_call.1} parent=35 // pred_check
              _
            $region38: #{tpu_custom_call.1} parent=35 // pred_check_branch
              %287 = sbr.rel (0) target = $region40
            $region39: #{tpu_custom_call.1} parent=35 // pred_region
              // Predicated region
              $region59: #{tpu_custom_call.1} parent=39 // pred_check
                _
              $region60: #{tpu_custom_call.1} parent=39 // pred_check_branch
                %338 = sbr.rel (0) target = $region62
              $region61: #{tpu_custom_call.1} parent=39 // pred_region
                %s339 = sshrl.u32 %s278, 1
                // While loop
                $region63: #{tpu_custom_call.1} parent=61 // loop_pre_header
                  _
                $region64: #{tpu_custom_call.1} parent=61 // loop_header
                  %s341 = sphi 0, %s343
                  %p342 = scmp.ge.s32.totalorder %s341, %s339
                  %s346 = sphi 0, %s355
                  %s347 = sphi %s271, %s358
                  %s348 = sphi %s282, %s359
                $region65: #{tpu_custom_call.1} parent=61 // loop_header_branch
                  %345 = sbr.rel (%p342) target = $region69
                $region66: #{tpu_custom_call.1} parent=61 // loop_body
                  %v349 = vld [vmem:[%s347] sm:$0xff]
                  %350 = vst [vmem:[%s348] sm:$0xff] %v349
                  %v351 = vld [vmem:[%s347 + $0x8] sm:$0xff]
                  %352 = vst [vmem:[%s348 + $0x8] sm:$0xff] %v351
                  %s353 = sadd.s32 1, %s346
                  %p354 = scmp.ge.s32.totalorder %s353, %s339
                  %s355 = scalar_select %p354, 0, %s353
                  %s356 = smul.u32 %s355, 16
                  %s357 = smul.u32 %s355, 16
                  %s358 = scalar_lea.vmem %s271, %s356 [#allocation2]
                  %s359 = scalar_lea.vmem %s282, %s357
                $region67: #{tpu_custom_call.1} parent=61 // loop_footer
                  %s343 = sadd.s32 %s341, 1
                $region68: #{tpu_custom_call.1} parent=61 // loop_footer_branch
                  %340 = sbr.rel target = $region64
                $region69: #{tpu_custom_call.1} parent=61 // loop_exit
                  _
                %s360 = sshrl.u32 %s278, 1
                %s361 = sand.u32 %s278, 1
                %s362 = smul.u32 %s360, 2
                %s363 = smul.u32 8, %s362
                %s364 = scalar_lea.vmem %s271, %s363 [#allocation2]
                %s365 = smul.u32 8, %s362
                %s366 = scalar_lea.vmem %s282, %s365
                // While loop
                $region70: #{tpu_custom_call.1} parent=61 // loop_pre_header
                  _
                $region71: #{tpu_custom_call.1} parent=61 // loop_header
                  %s368 = sphi 0, %s370
                  %p369 = scmp.ge.s32.totalorder %s368, %s361
                  %s373 = sphi 0, %s380
                  %s374 = sphi %s364, %s383
                  %s375 = sphi %s366, %s384
                $region72: #{tpu_custom_call.1} parent=61 // loop_header_branch
                  %372 = sbr.rel (%p369) target = $region76
                $region73: #{tpu_custom_call.1} parent=61 // loop_body
                  %v376 = vld [vmem:[%s374] sm:$0xff]
                  %377 = vst [vmem:[%s375] sm:$0xff] %v376
                  %s378 = sadd.s32 1, %s373
                  %p379 = scmp.ge.s32.totalorder %s378, %s361
                  %s380 = scalar_select %p379, 0, %s378
                  %s381 = smul.u32 %s380, 8
                  %s382 = smul.u32 %s380, 8
                  %s383 = scalar_lea.vmem %s364, %s381 [#allocation2]
                  %s384 = scalar_lea.vmem %s366, %s382
                $region74: #{tpu_custom_call.1} parent=61 // loop_footer
                  %s370 = sadd.s32 %s368, 1
                $region75: #{tpu_custom_call.1} parent=61 // loop_footer_branch
                  %367 = sbr.rel target = $region71
                $region76: #{tpu_custom_call.1} parent=61 // loop_exit
                  _
              $region62: #{tpu_custom_call.1} parent=39 // pred_fallthru
                _
              // Predicated region
              $region77: #{tpu_custom_call.1} parent=39 // pred_check
                _
              $region78: #{tpu_custom_call.1} parent=39 // pred_check_branch
                %386 = sbr.rel target = $region80
              $region79: #{tpu_custom_call.1} parent=39 // pred_region
                _
              $region80: #{tpu_custom_call.1} parent=39 // pred_fallthru
                _
            $region40: #{tpu_custom_call.1} parent=35 // pred_fallthru
              _
            // Predicated region
            $region41: #{tpu_custom_call.1} parent=35 // pred_check
              _
            $region42: #{tpu_custom_call.1} parent=35 // pred_check_branch
              %289 = sbr.rel target = $region44
            $region43: #{tpu_custom_call.1} parent=35 // pred_region
              %s291 = sshrl.u32 %s278, 1
              // While loop
              $region45: #{tpu_custom_call.1} parent=43 // loop_pre_header
                _
              $region46: #{tpu_custom_call.1} parent=43 // loop_header
                %s293 = sphi 0, %s295
                %p294 = scmp.ge.s32.totalorder %s293, %s291
                %s298 = sphi 0, %s307
                %s299 = sphi %s271, %s310
                %s300 = sphi %s282, %s311
              $region47: #{tpu_custom_call.1} parent=43 // loop_header_branch
                %297 = sbr.rel (%p294) target = $region51
              $region48: #{tpu_custom_call.1} parent=43 // loop_body
                %v301 = vld [vmem:[%s299] sm:$0xff]
                %302 = vst [vmem:[%s300] sm:$0xff] %v301
                %v303 = vld [vmem:[%s299 + $0x8] sm:$0xff]
                %304 = vst [vmem:[%s300 + $0x8] sm:$0xff] %v303
                %s305 = sadd.s32 1, %s298
                %p306 = scmp.ge.s32.totalorder %s305, %s291
                %s307 = scalar_select %p306, 0, %s305
                %s308 = smul.u32 %s307, 16
                %s309 = smul.u32 %s307, 16
                %s310 = scalar_lea.vmem %s271, %s308 [#allocation2]
                %s311 = scalar_lea.vmem %s282, %s309
              $region49: #{tpu_custom_call.1} parent=43 // loop_footer
                %s295 = sadd.s32 %s293, 1
              $region50: #{tpu_custom_call.1} parent=43 // loop_footer_branch
                %292 = sbr.rel target = $region46
              $region51: #{tpu_custom_call.1} parent=43 // loop_exit
                _
              %s312 = sshrl.u32 %s278, 1
              %s313 = sand.u32 %s278, 1
              %s314 = smul.u32 %s312, 2
              %s315 = smul.u32 8, %s314
              %s316 = scalar_lea.vmem %s271, %s315 [#allocation2]
              %s317 = smul.u32 8, %s314
              %s318 = scalar_lea.vmem %s282, %s317
              // While loop
              $region52: #{tpu_custom_call.1} parent=43 // loop_pre_header
                _
              $region53: #{tpu_custom_call.1} parent=43 // loop_header
                %s320 = sphi 0, %s322
                %p321 = scmp.ge.s32.totalorder %s320, %s313
                %s325 = sphi 0, %s332
                %s326 = sphi %s316, %s335
                %s327 = sphi %s318, %s336
              $region54: #{tpu_custom_call.1} parent=43 // loop_header_branch
                %324 = sbr.rel (%p321) target = $region58
              $region55: #{tpu_custom_call.1} parent=43 // loop_body
                %v328 = vld [vmem:[%s326] sm:$0xff]
                %329 = vst [vmem:[%s327] sm:$0xff] %v328
                %s330 = sadd.s32 1, %s325
                %p331 = scmp.ge.s32.totalorder %s330, %s313
                %s332 = scalar_select %p331, 0, %s330
                %s333 = smul.u32 %s332, 8
                %s334 = smul.u32 %s332, 8
                %s335 = scalar_lea.vmem %s316, %s333 [#allocation2]
                %s336 = scalar_lea.vmem %s318, %s334
              $region56: #{tpu_custom_call.1} parent=43 // loop_footer
                %s322 = sadd.s32 %s320, 1
              $region57: #{tpu_custom_call.1} parent=43 // loop_footer_branch
                %319 = sbr.rel target = $region53
              $region58: #{tpu_custom_call.1} parent=43 // loop_exit
                _
            $region44: #{tpu_custom_call.1} parent=35 // pred_fallthru
              _
          $region36: #{tpu_custom_call.1} parent=31 // pred_fallthru
            _
          %387 = vnop
        $region32: #{tpu_custom_call.1} parent=27 // pred_fallthru
          _
      $region28: #{tpu_custom_call.1} parent=5 // pred_fallthru
        _
      %p388 = scmp.le.s32.totalorder 2, %s8
      // Predicated region
      $region81: #{tpu_custom_call.1} parent=5 // pred_check
        %p389 = pneg %p388
      $region82: #{tpu_custom_call.1} parent=5 // pred_check_branch
        %391 = sbr.rel (%p389) target = $region84
      $region83: #{tpu_custom_call.1} parent=5 // pred_region
        %s392 = ssub.s32 %s8, 2
        // Predicated region
        $region85: #{tpu_custom_call.1} parent=83 // pred_check
          %p393 = pneg %p89
        $region86: #{tpu_custom_call.1} parent=83 // pred_check_branch
          %395 = sbr.rel (%p393) target = $region88
        $region87: #{tpu_custom_call.1} parent=83 // pred_region
          %s396 = sand.u32 %s74, 1
          %s397 = sand.u32 %s74, 1
          %s398 = smul.addr %s397, 16
          %s399 = scalar_lea.vmem [#allocation2], %s398
        $region88: #{tpu_custom_call.1} parent=83 // pred_fallthru
          _
      $region84: #{tpu_custom_call.1} parent=5 // pred_fallthru
        _
    $region6: #{tpu_custom_call.1} parent=1 // loop_footer
      %s12 = sadd.s32 1, %s8
    $region7: #{tpu_custom_call.1} parent=1 // loop_footer_branch
      %7 = sbr.rel target = $region3
    $region8: #{tpu_custom_call.1} parent=1 // loop_exit
      _

</llo_original>
